<compile_context>
chip_gen: v6e
topology: v6e:2x2x1
jax: 0.10.0
libtpu: 0.0.40
codegen_flags: <defaults>
</compile_context>

<pallas_src>
import functools

import jax
import jax.numpy as jnp
from jax.experimental import pallas as pl
from jax.experimental.pallas import tpu as pltpu


def _vae_encode_kernel(
    x_ref, w_ref, eps_ref, out_ref,
    *, fan_ins, fan_outs, latent, bias_row, compute_dtype,
):
    """One batch tile of the full encoder: 4 matmuls + ReLUs + reparameterize."""
    cdt = compute_dtype

    def dense(h, idx):
        # w_ref: [4, max_fan_in + 1, max_fan_out]; layer idx uses
        #   rows [0:fan_in]  -> W  (stored [in, out])
        #   row  bias_row    -> b
        # (zero padding elsewhere; slices below are static -> no runtime cost)
        fi = fan_ins[idx]
        fo = fan_outs[idx]
        w2d = w_ref[idx]                              # [max_fan_in+1, max_fan_out]
        w = w2d[:fi, :fo]
        b = w2d[bias_row:bias_row + 1, :fo]
        acc = jnp.dot(h.astype(cdt), w.astype(cdt),
                      preferred_element_type=jnp.float32)
        return acc + b  # bias add / activations stay f32 (v5e has no bf16 VPU)

    # encode_nn: 3x (Linear -> ReLU)
    h = jnp.maximum(dense(x_ref[...], 0), 0.0)
    h = jnp.maximum(dense(h, 1), 0.0)
    h = jnp.maximum(dense(h, 2), 0.0)

    # Fused mu / log_var head: one [l3, 2*latent] matmul -> [ mu | log_var ].
    heads = dense(h, 3)
    mu = heads[:, :latent]
    log_var = heads[:, latent:]

    # reparameterize: z = eps * exp(0.5 * log_var) + mu   (exp goes to the EUP)
    std = jnp.exp(0.5 * log_var)
    z = eps_ref[...] * std + mu

    # Single lane-packed output slab: [ z | mu | log_var ] (heads already packed).
    out_ref[...] = jnp.concatenate([z, heads], axis=-1)


def vae_encode(x, params, eps, *, compute_dtype=jnp.float32, block_b=512):
    """VAE encoder forward pass as one Pallas call.

    x:      [B, F] float32
    params: dict of PyTorch-style weights stored as [in, out] and biases [1, out]
    eps:    [B, latent] float32 standard-normal reparameterization noise
    returns (z, mu, log_var), each [B, latent] float32
    """
    B, in_dim = x.shape
    l1 = params["w1"].shape[1]
    l2 = params["w2"].shape[1]
    l3 = params["w3"].shape[1]
    latent = params["w_mu"].shape[1]

    fan_ins = (in_dim, l1, l2, l3)
    fan_outs = (l1, l2, l3, 2 * latent)
    max_fi = max(fan_ins)
    max_fo = max(fan_outs)
    bias_row = max_fi  # bias lives in the last row of every padded slab

    # --- parameter packing (cheap XLA ops, constant-folded under jit) --------
    # Fuse the two heads on the lane axis, then pad every bias-augmented weight
    # to a common [max_fi+1, max_fo] slab and stack -> ONE kernel operand.
    w_heads = jnp.concatenate([params["w_mu"], params["w_lv"]], axis=1)
    b_heads = jnp.concatenate([params["b_mu"], params["b_lv"]], axis=1)
    ws = (params["w1"], params["w2"], params["w3"], w_heads)
    bs = (params["b1"], params["b2"], params["b3"], b_heads)

    def pad_slab(w, b):
        fi, fo = w.shape
        slab = jnp.zeros((max_fi + 1, max_fo), jnp.float32)
        slab = slab.at[:fi, :fo].set(w.astype(jnp.float32))
        slab = slab.at[bias_row, :fo].set(b.reshape(-1).astype(jnp.float32))
        return slab

    w_all = jnp.stack([pad_slab(w, b) for w, b in zip(ws, bs)], axis=0)
    # w_all: [4, max_fi+1, max_fo]  (~33 KB for the reference config)

    # --- batch tiling ---------------------------------------------------------
    if B <= block_b:
        tb = B            # single block covering the whole (small) batch
    else:
        tb = block_b      # multiple of 8; last block may be ragged (masked)
        assert tb % 8 == 0, "block_b must be a multiple of 8"
    grid = (pl.cdiv(B, tb),)

    kernel = functools.partial(
        _vae_encode_kernel,
        fan_ins=fan_ins, fan_outs=fan_outs, latent=latent,
        bias_row=bias_row, compute_dtype=compute_dtype,
    )

    packed = pl.pallas_call(
        kernel,
        out_shape=jax.ShapeDtypeStruct((B, 3 * latent), jnp.float32),
        grid_spec=pltpu.PrefetchScalarGridSpec(
            num_scalar_prefetch=0,
            grid=grid,
            in_specs=[
                pl.BlockSpec((tb, in_dim), lambda i: (i, 0)),        # x batch tile
                # same block every step -> parameters stay resident in VMEM
                pl.BlockSpec(w_all.shape, lambda i: (0, 0, 0)),
                pl.BlockSpec((tb, latent), lambda i: (i, 0)),        # eps batch tile
            ],
            out_specs=pl.BlockSpec((tb, 3 * latent), lambda i: (i, 0)),
        ),
        compiler_params=pltpu.CompilerParams(
            # batch tiles are independent -> shard across v7x's 2 TensorCores
            dimension_semantics=("parallel",),
        ),
    )(x, w_all, eps)

    z = packed[:, :latent]
    mu = packed[:, latent:2 * latent]
    log_var = packed[:, 2 * latent:]
    return z, mu, log_var


def init_params(key, in_dim, l1, l2, l3, latent):
    """Deterministic synthetic weights (PyTorch Linear init, stored as [in, out])."""
    ks = jax.random.split(key, 10)

    def linear(kw, kb, fan_in, fan_out):
        bound = 1.0 / jnp.sqrt(fan_in)
        w = jax.random.uniform(kw, (fan_in, fan_out), jnp.float32, -bound, bound)
        b = jax.random.uniform(kb, (1, fan_out), jnp.float32, -bound, bound)
        return w, b

    w1, b1 = linear(ks[0], ks[1], in_dim, l1)
    w2, b2 = linear(ks[2], ks[3], l1, l2)
    w3, b3 = linear(ks[4], ks[5], l2, l3)
    w_mu, b_mu = linear(ks[6], ks[7], l3, latent)
    w_lv, b_lv = linear(ks[8], ks[9], l3, latent)
    return dict(
        w1=w1, b1=b1, w2=w2, b2=b2, w3=w3, b3=b3,
        w_mu=w_mu, b_mu=b_mu, w_lv=w_lv, b_lv=b_lv,
    )


def _reference(x, p, eps):
    h = jnp.maximum(x @ p["w1"] + p["b1"], 0.0)
    h = jnp.maximum(h @ p["w2"] + p["b2"], 0.0)
    h = jnp.maximum(h @ p["w3"] + p["b3"], 0.0)
    mu = h @ p["w_mu"] + p["b_mu"]
    lv = h @ p["w_lv"] + p["b_lv"]
    z = eps * jnp.exp(0.5 * lv) + mu
    return z, mu, lv


if __name__ == "__main__":
    # Shapes consistent with the module's forward:
    #   len_max_molec1Hot = 64, layer_1d = layer_2d = layer_3d = 32, latent = 16
    B, IN_DIM, L1, L2, L3, LATENT = 2, 64, 32, 32, 32, 16

    key = jax.random.PRNGKey(0)
    k_x, k_eps, k_params, k_x2, k_eps2 = jax.random.split(key, 5)

    params = init_params(k_params, IN_DIM, L1, L2, L3, LATENT)

    # TODO(synk): torch.randn_like inside reparameterize is replaced by caller-
    # supplied eps (host-side jax.random) to keep the kernel deterministic.

    # --- small batch (single grid step) --------------------------------------
    x = jax.random.normal(k_x, (B, IN_DIM), dtype=jnp.float32)
    eps = jax.random.normal(k_eps, (B, LATENT), dtype=jnp.float32)

    z, mu, lv = vae_encode(x, params, eps)
    jax.block_until_ready((z, mu, lv))

    z_r, mu_r, lv_r = _reference(x, params, eps)
    assert jnp.allclose(z, z_r, atol=1e-4), "z mismatch (small batch)"
    assert jnp.allclose(mu, mu_r, atol=1e-4), "mu mismatch (small batch)"
    assert jnp.allclose(lv, lv_r, atol=1e-4), "log_var mismatch (small batch)"

    # --- larger batch exercising the multi-tile grid + resident weights ------
    B2 = 512
    x2 = jax.random.normal(k_x2, (B2, IN_DIM), dtype=jnp.float32)
    eps2 = jax.random.normal(k_eps2, (B2, LATENT), dtype=jnp.float32)

    z2, mu2, lv2 = vae_encode(x2, params, eps2, block_b=256)
    jax.block_until_ready((z2, mu2, lv2))

    z2_r, mu2_r, lv2_r = _reference(x2, params, eps2)
    assert jnp.allclose(z2, z2_r, atol=1e-4), "z mismatch (large batch)"
    assert jnp.allclose(mu2, mu2_r, atol=1e-4), "mu mismatch (large batch)"
    assert jnp.allclose(lv2, lv2_r, atol=1e-4), "log_var mismatch (large batch)"

    print("KERNEL_OK")
</pallas_src>

<mosaic_0001>
module attributes {stable_mosaic.version = 11 : i64} {
  func.func @_vae_encode_kernel(%arg0: i32, %arg1: memref<2x64xf32, #tpu.memory_space<vmem>>, %arg2: memref<4x65x32xf32, #tpu.memory_space<vmem>>, %arg3: memref<2x16xf32, #tpu.memory_space<vmem>>, %arg4: memref<2x48xf32, #tpu.memory_space<vmem>>) attributes {dimension_semantics = [#tpu.dimension_semantics<parallel>], iteration_bounds = array<i64: 1>, scalar_prefetch = 0 : i64, scratch_operands = 0 : i64, tpu.core_type = #tpu.core_type<tc>, window_params = [{transform_indices = @transform_0, window_bounds = array<i64: 2, 64>}, {pipeline_mode = #tpu.pipeline_mode<synchronous>, transform_indices = @transform_1, window_bounds = array<i64: 4, 65, 32>}, {transform_indices = @transform_2, window_bounds = array<i64: 2, 16>}, {transform_indices = @transform_3, window_bounds = array<i64: 2, 48>}]} {
    %c0 = arith.constant 0 : index
    %c0_0 = arith.constant 0 : index
    %0 = vector.load %arg1[%c0, %c0_0] : memref<2x64xf32, #tpu.memory_space<vmem>>, vector<2x64xf32>
    %c0_1 = arith.constant 0 : index
    %c0_2 = arith.constant 0 : index
    %c0_3 = arith.constant 0 : index
    %1 = vector.load %arg2[%c0_1, %c0_2, %c0_3] : memref<4x65x32xf32, #tpu.memory_space<vmem>>, vector<1x65x32xf32>
    %2 = vector.shape_cast %1 : vector<1x65x32xf32> to vector<65x32xf32>
    %3 = vector.extract_strided_slice %2 {offsets = [0, 0], sizes = [64, 32], strides = [1, 1]} : vector<65x32xf32> to vector<64x32xf32>
    %4 = vector.extract_strided_slice %2 {offsets = [64, 0], sizes = [1, 32], strides = [1, 1]} : vector<65x32xf32> to vector<1x32xf32>
    %cst = arith.constant dense<0.000000e+00> : vector<2x32xf32>
    %5 = tpu.matmul %0, %3, %cst {dimension_numbers = #tpu.dot_dimension_numbers<[1], [0], [0], [1], [0, 0, 1, 1], [], []>} : vector<2x64xf32>, vector<64x32xf32>, vector<2x32xf32> -> vector<2x32xf32>
    %6 = vector.broadcast %4 : vector<1x32xf32> to vector<2x32xf32>
    %7 = arith.addf %5, %6 : vector<2x32xf32>
    %cst_4 = arith.constant 0.000000e+00 : f32
    %8 = vector.broadcast %cst_4 : f32 to vector<2x32xf32>
    %9 = arith.maximumf %7, %8 : vector<2x32xf32>
    %c1 = arith.constant 1 : index
    %c0_5 = arith.constant 0 : index
    %c0_6 = arith.constant 0 : index
    %10 = vector.load %arg2[%c1, %c0_5, %c0_6] : memref<4x65x32xf32, #tpu.memory_space<vmem>>, vector<1x65x32xf32>
    %11 = vector.shape_cast %10 : vector<1x65x32xf32> to vector<65x32xf32>
    %12 = vector.extract_strided_slice %11 {offsets = [0, 0], sizes = [32, 32], strides = [1, 1]} : vector<65x32xf32> to vector<32x32xf32>
    %13 = vector.extract_strided_slice %11 {offsets = [64, 0], sizes = [1, 32], strides = [1, 1]} : vector<65x32xf32> to vector<1x32xf32>
    %cst_7 = arith.constant dense<0.000000e+00> : vector<2x32xf32>
    %14 = tpu.matmul %9, %12, %cst_7 {dimension_numbers = #tpu.dot_dimension_numbers<[1], [0], [0], [1], [0, 0, 1, 1], [], []>} : vector<2x32xf32>, vector<32x32xf32>, vector<2x32xf32> -> vector<2x32xf32>
    %15 = vector.broadcast %13 : vector<1x32xf32> to vector<2x32xf32>
    %16 = arith.addf %14, %15 : vector<2x32xf32>
    %cst_8 = arith.constant 0.000000e+00 : f32
    %17 = vector.broadcast %cst_8 : f32 to vector<2x32xf32>
    %18 = arith.maximumf %16, %17 : vector<2x32xf32>
    %c2 = arith.constant 2 : index
    %c0_9 = arith.constant 0 : index
    %c0_10 = arith.constant 0 : index
    %19 = vector.load %arg2[%c2, %c0_9, %c0_10] : memref<4x65x32xf32, #tpu.memory_space<vmem>>, vector<1x65x32xf32>
    %20 = vector.shape_cast %19 : vector<1x65x32xf32> to vector<65x32xf32>
    %21 = vector.extract_strided_slice %20 {offsets = [0, 0], sizes = [32, 32], strides = [1, 1]} : vector<65x32xf32> to vector<32x32xf32>
    %22 = vector.extract_strided_slice %20 {offsets = [64, 0], sizes = [1, 32], strides = [1, 1]} : vector<65x32xf32> to vector<1x32xf32>
    %cst_11 = arith.constant dense<0.000000e+00> : vector<2x32xf32>
    %23 = tpu.matmul %18, %21, %cst_11 {dimension_numbers = #tpu.dot_dimension_numbers<[1], [0], [0], [1], [0, 0, 1, 1], [], []>} : vector<2x32xf32>, vector<32x32xf32>, vector<2x32xf32> -> vector<2x32xf32>
    %24 = vector.broadcast %22 : vector<1x32xf32> to vector<2x32xf32>
    %25 = arith.addf %23, %24 : vector<2x32xf32>
    %cst_12 = arith.constant 0.000000e+00 : f32
    %26 = vector.broadcast %cst_12 : f32 to vector<2x32xf32>
    %27 = arith.maximumf %25, %26 : vector<2x32xf32>
    %c3 = arith.constant 3 : index
    %c0_13 = arith.constant 0 : index
    %c0_14 = arith.constant 0 : index
    %28 = vector.load %arg2[%c3, %c0_13, %c0_14] : memref<4x65x32xf32, #tpu.memory_space<vmem>>, vector<1x65x32xf32>
    %29 = vector.shape_cast %28 : vector<1x65x32xf32> to vector<65x32xf32>
    %30 = vector.extract_strided_slice %29 {offsets = [0, 0], sizes = [32, 32], strides = [1, 1]} : vector<65x32xf32> to vector<32x32xf32>
    %31 = vector.extract_strided_slice %29 {offsets = [64, 0], sizes = [1, 32], strides = [1, 1]} : vector<65x32xf32> to vector<1x32xf32>
    %cst_15 = arith.constant dense<0.000000e+00> : vector<2x32xf32>
    %32 = tpu.matmul %27, %30, %cst_15 {dimension_numbers = #tpu.dot_dimension_numbers<[1], [0], [0], [1], [0, 0, 1, 1], [], []>} : vector<2x32xf32>, vector<32x32xf32>, vector<2x32xf32> -> vector<2x32xf32>
    %33 = vector.broadcast %31 : vector<1x32xf32> to vector<2x32xf32>
    %34 = arith.addf %32, %33 : vector<2x32xf32>
    %35 = vector.extract_strided_slice %34 {offsets = [0, 0], sizes = [2, 16], strides = [1, 1]} : vector<2x32xf32> to vector<2x16xf32>
    %36 = vector.extract_strided_slice %34 {offsets = [0, 16], sizes = [2, 16], strides = [1, 1]} : vector<2x32xf32> to vector<2x16xf32>
    %cst_16 = arith.constant 5.000000e-01 : f32
    %37 = vector.broadcast %cst_16 : f32 to vector<2x16xf32>
    %38 = arith.mulf %37, %36 : vector<2x16xf32>
    %39 = math.exp %38 : vector<2x16xf32>
    %c0_17 = arith.constant 0 : index
    %c0_18 = arith.constant 0 : index
    %40 = vector.load %arg3[%c0_17, %c0_18] : memref<2x16xf32, #tpu.memory_space<vmem>>, vector<2x16xf32>
    %41 = arith.mulf %40, %39 : vector<2x16xf32>
    %42 = arith.addf %41, %35 : vector<2x16xf32>
    %43 = tpu.concatenate %42, %34 in 1 : vector<2x16xf32>, vector<2x32xf32> -> vector<2x48xf32>
    %c0_19 = arith.constant 0 : index
    %c0_20 = arith.constant 0 : index
    %44 = vector.load %arg4[%c0_19, %c0_20] : memref<2x48xf32, #tpu.memory_space<vmem>>, vector<2x48xf32>
    tpu.vector_store %arg4[%c0_19, %c0_20], %43 {strides = array<i32>} : memref<2x48xf32, #tpu.memory_space<vmem>>, vector<2x48xf32>,
    return
  }
  func.func @transform_0(%arg0: i32) -> (i32, i32) {
    %c0_i32 = arith.constant 0 : i32
    %c0_i32_0 = arith.constant 0 : i32
    return %arg0, %c0_i32 : i32, i32
  }
  func.func @transform_1(%arg0: i32) -> (i32, i32, i32) {
    %c0_i32 = arith.constant 0 : i32
    %c0_i32_0 = arith.constant 0 : i32
    %c0_i32_1 = arith.constant 0 : i32
    %c0_i32_2 = arith.constant 0 : i32
    return %c0_i32, %c0_i32_0, %c0_i32_1 : i32, i32, i32
  }
  func.func @transform_2(%arg0: i32) -> (i32, i32) {
    %c0_i32 = arith.constant 0 : i32
    %c0_i32_0 = arith.constant 0 : i32
    return %arg0, %c0_i32 : i32, i32
  }
  func.func @transform_3(%arg0: i32) -> (i32, i32) {
    %c0_i32 = arith.constant 0 : i32
    %c0_i32_0 = arith.constant 0 : i32
    return %arg0, %c0_i32 : i32, i32
  }
}

</mosaic_0001>

<llo_original>
// kernel: tpu_custom_call.1
$region0: #{tpu_custom_call.1}
  #allocation0 [shape = 'u32[]', space=smem, size = 0x4, offset = 0x4, fixed_abs, tag = 'smem constant byte address 0x4 - core index']
  #allocation1 [shape = 'u32[144,128]{1,0:T(1,128)}', space=vmem, size = 0x12000, scoped, tag = 'internal scratch']
  %s0 = inlined_call_operand.vmem [shape: f32[2,64], index: 0, kind: input, shape index: {}]
  %s1 = inlined_call_operand.vmem [shape: f32[4,65,32], index: 1, kind: input, shape index: {}]
  %s2 = inlined_call_operand.vmem [shape: f32[2,16], index: 2, kind: input, shape index: {}]
  %s3 = inlined_call_operand.hbm [shape: f32[2,48], index: 3, kind: output, shape index: {}]
  %s4 = sld [smem:[#allocation0]]
  $region22: #{tpu_custom_call.1} parent=0
    _
  %s6 = ssub.s32 1, %s4
  %s7 = scalar_select 0, %s6, %s4
  $region1: #{tpu_custom_call.1} parent=0
    #allocation2 [shape = 'u8[1024]{0}', space=vmem, size = 0x400, scoped, tag = 'output window, operand 0, single buffered']
    #allocation3 [shape = 's32[1]{0}', space=sflag, size = 0x4, scoped, tag = 'scoped memory for tpu_custom_call.1']
    %8 = vsyncpa [#allocation3], 0
    // Predicated region
    $region2: #{tpu_custom_call.1} parent=1 // pred_check
      _
    $region3: #{tpu_custom_call.1} parent=1 // pred_check_branch
      %10 = sbr.rel (0) target = $region5
    $region4: #{tpu_custom_call.1} parent=1 // pred_region
      _
    $region5: #{tpu_custom_call.1} parent=1 // pred_fallthru
      _
    // Predicated region
    $region6: #{tpu_custom_call.1} parent=1 // pred_check
      _
    $region7: #{tpu_custom_call.1} parent=1 // pred_check_branch
      %12 = sbr.rel (0) target = $region9
    $region8: #{tpu_custom_call.1} parent=1 // pred_region
      _
    $region9: #{tpu_custom_call.1} parent=1 // pred_fallthru
      _
    // Predicated region
    $region10: #{tpu_custom_call.1} parent=1 // pred_check
      _
    $region11: #{tpu_custom_call.1} parent=1 // pred_check_branch
      %14 = sbr.rel (0) target = $region13
    $region12: #{tpu_custom_call.1} parent=1 // pred_region
      _
    $region13: #{tpu_custom_call.1} parent=1 // pred_fallthru
      _
    %v15 = vld [vmem:[%s0] sm:$0x3]
    %v16 = vld [vmem:[%s1] sm:$0xff]
    %v17 = vld [vmem:[%s1 + $0x8] sm:$0xff]
    %v18 = vld [vmem:[%s1 + $0x10] sm:$0xff]
    %v19 = vld [vmem:[%s1 + $0x18] sm:$0xff]
    %v20 = vld [vmem:[%s1 + $0x20] sm:$0xff]
    %v21 = vld [vmem:[%s1 + $0x28] sm:$0xff]
    %v22 = vld [vmem:[%s1 + $0x30] sm:$0xff]
    %v23 = vld [vmem:[%s1 + $0x38] sm:$0xff]
    %v24 = vld [vmem:[%s1 + $0x40] sm:$0x1]
    %v25 = vlaneseq
    %v26 = vshrl.u32 %v25, 7
    %v27 = vsub.s32 0, %v26
    %v28 = vrot.slane %v24, %v27
    %vm29 = vcmask 523264
    %v31 = vsel %vm29, %v15, 0
    %33 = vmatprep.subr.mxu0 0.0
    %34 = vmatpush1.msra.mxu0 0.0
    %35 = vmatprep.subr.mxu0 0.0
    %36 = vmatpush1.msra.mxu0 0.0
    %37 = vmatprep.subr.mxu0 0.0
    %38 = vmatpush1.msra.mxu0 0.0
    %39 = vmatprep.subr.mxu0 0.0
    %40 = vmatpush1.msra.mxu0 0.0
    %41 = vmatprep.subr.mxu0 0.0
    %42 = vmatpush1.msra.mxu0 0.0
    %43 = vmatprep.subr.mxu0 0.0
    %44 = vmatpush1.msra.mxu0 0.0
    %45 = vmatprep.subr.mxu0 0.0
    %46 = vmatpush1.msra.mxu0 0.0
    %47 = vmatprep.subr.mxu0 0.0
    %48 = vmatpush1.msra.mxu0 0.0
    %49 = vmatprep.subr.mxu0 0.0
    %50 = vmatpush1.msra.mxu0 %v23
    %51 = vmatprep.subr.mxu0 0.0
    %52 = vmatpush1.msra.mxu0 %v22
    %53 = vmatprep.subr.mxu0 0.0
    %54 = vmatpush1.msra.mxu0 %v21
    %55 = vmatprep.subr.mxu0 0.0
    %56 = vmatpush1.msra.mxu0 %v20
    %57 = vmatprep.subr.mxu0 0.0
    %58 = vmatpush1.msra.mxu0 %v19
    %59 = vmatprep.subr.mxu0 0.0
    %60 = vmatpush1.msra.mxu0 %v18
    %61 = vmatprep.subr.mxu0 0.0
    %62 = vmatpush1.msra.mxu0 %v17
    %63 = vmatprep.subr.mxu0 0.0
    %64 = vmatpush1.msra.mxu0 %v16
    %65 = vmatprep.subr.mxu0 0.0
    %66 = vmatpush2.msra.mxu0 0.0
    %67 = vmatprep.subr.mxu0 0.0
    %68 = vmatpush2.msra.mxu0 0.0
    %69 = vmatprep.subr.mxu0 0.0
    %70 = vmatpush2.msra.mxu0 0.0
    %71 = vmatprep.subr.mxu0 0.0
    %72 = vmatpush2.msra.mxu0 0.0
    %73 = vmatprep.subr.mxu0 0.0
    %74 = vmatpush2.msra.mxu0 0.0
    %75 = vmatprep.subr.mxu0 0.0
    %76 = vmatpush2.msra.mxu0 0.0
    %77 = vmatprep.subr.mxu0 0.0
    %78 = vmatpush2.msra.mxu0 0.0
    %79 = vmatprep.subr.mxu0 0.0
    %80 = vmatpush2.msra.mxu0 0.0
    %81 = vmatprep.subr.mxu0 0.0
    %82 = vmatpush2.msra.mxu0 0.0
    %83 = vmatprep.subr.mxu0 0.0
    %84 = vmatpush2.msra.mxu0 0.0
    %85 = vmatprep.subr.mxu0 0.0
    %86 = vmatpush2.msra.mxu0 0.0
    %87 = vmatprep.subr.mxu0 0.0
    %88 = vmatpush2.msra.mxu0 0.0
    %89 = vmatprep.subr.mxu0 0.0
    %90 = vmatpush2.msra.mxu0 0.0
    %91 = vmatprep.subr.mxu0 0.0
    %92 = vmatpush2.msra.mxu0 0.0
    %93 = vmatprep.subr.mxu0 0.0
    %94 = vmatpush2.msra.mxu0 0.0
    %95 = vmatprep.subr.mxu0 0.0
    %96 = vmatpush2.msra.mxu0 0.0
    %97 = vmatprep.mubr.f32.mxu0 0.0
    %98 = vmatmul.mubr.f32.gmra.mxu0 %v31
    %v99 = vpop.f32.mrf.mxu0
    %v100 = vadd.f32 %v28, %v99
    %v101 = vpop.f32.mrf.mxu0
    %102 = vdwg.mxu0
    %v103 = vmax.f32 %v100, 0.0
    %s104 = scalar_lea.vmem %s1, 72
    %v105 = vld [vmem:[%s104] sm:$0xff]
    %v106 = vld [vmem:[%s104 + $0x8] sm:$0xff]
    %v107 = vld [vmem:[%s104 + $0x10] sm:$0xff]
    %v108 = vld [vmem:[%s104 + $0x18] sm:$0xff]
    %v109 = vld [vmem:[%s104 + $0x40] sm:$0x1]
    %v110 = vlaneseq
    %v111 = vshrl.u32 %v110, 7
    %v112 = vsub.s32 0, %v111
    %v113 = vrot.slane %v109, %v112
    %vm114 = vcmask 261120
    %v116 = vsel %vm114, %v103, 0
    %118 = vmatprep.subr.mxu0 0.0
    %119 = vmatpush1.msra.mxu0 0.0
    %120 = vmatprep.subr.mxu0 0.0
    %121 = vmatpush1.msra.mxu0 0.0
    %122 = vmatprep.subr.mxu0 0.0
    %123 = vmatpush1.msra.mxu0 0.0
    %124 = vmatprep.subr.mxu0 0.0
    %125 = vmatpush1.msra.mxu0 0.0
    %126 = vmatprep.subr.mxu0 0.0
    %127 = vmatpush1.msra.mxu0 0.0
    %128 = vmatprep.subr.mxu0 0.0
    %129 = vmatpush1.msra.mxu0 0.0
    %130 = vmatprep.subr.mxu0 0.0
    %131 = vmatpush1.msra.mxu0 0.0
    %132 = vmatprep.subr.mxu0 0.0
    %133 = vmatpush1.msra.mxu0 0.0
    %134 = vmatprep.subr.mxu0 0.0
    %135 = vmatpush1.msra.mxu0 0.0
    %136 = vmatprep.subr.mxu0 0.0
    %137 = vmatpush1.msra.mxu0 0.0
    %138 = vmatprep.subr.mxu0 0.0
    %139 = vmatpush1.msra.mxu0 0.0
    %140 = vmatprep.subr.mxu0 0.0
    %141 = vmatpush1.msra.mxu0 0.0
    %142 = vmatprep.subr.mxu0 0.0
    %143 = vmatpush1.msra.mxu0 %v108
    %144 = vmatprep.subr.mxu0 0.0
    %145 = vmatpush1.msra.mxu0 %v107
    %146 = vmatprep.subr.mxu0 0.0
    %147 = vmatpush1.msra.mxu0 %v106
    %148 = vmatprep.subr.mxu0 0.0
    %149 = vmatpush1.msra.mxu0 %v105
    %150 = vmatprep.subr.mxu0 0.0
    %151 = vmatpush2.msra.mxu0 0.0
    %152 = vmatprep.subr.mxu0 0.0
    %153 = vmatpush2.msra.mxu0 0.0
    %154 = vmatprep.subr.mxu0 0.0
    %155 = vmatpush2.msra.mxu0 0.0
    %156 = vmatprep.subr.mxu0 0.0
    %157 = vmatpush2.msra.mxu0 0.0
    %158 = vmatprep.subr.mxu0 0.0
    %159 = vmatpush2.msra.mxu0 0.0
    %160 = vmatprep.subr.mxu0 0.0
    %161 = vmatpush2.msra.mxu0 0.0
    %162 = vmatprep.subr.mxu0 0.0
    %163 = vmatpush2.msra.mxu0 0.0
    %164 = vmatprep.subr.mxu0 0.0
    %165 = vmatpush2.msra.mxu0 0.0
    %166 = vmatprep.subr.mxu0 0.0
    %167 = vmatpush2.msra.mxu0 0.0
    %168 = vmatprep.subr.mxu0 0.0
    %169 = vmatpush2.msra.mxu0 0.0
    %170 = vmatprep.subr.mxu0 0.0
    %171 = vmatpush2.msra.mxu0 0.0
    %172 = vmatprep.subr.mxu0 0.0
    %173 = vmatpush2.msra.mxu0 0.0
    %174 = vmatprep.subr.mxu0 0.0
    %175 = vmatpush2.msra.mxu0 0.0
    %176 = vmatprep.subr.mxu0 0.0
    %177 = vmatpush2.msra.mxu0 0.0
    %178 = vmatprep.subr.mxu0 0.0
    %179 = vmatpush2.msra.mxu0 0.0
    %180 = vmatprep.subr.mxu0 0.0
    %181 = vmatpush2.msra.mxu0 0.0
    %182 = vmatprep.mubr.f32.mxu0 0.0
    %183 = vmatmul.mubr.f32.gmra.mxu0 %v116
    %v184 = vpop.f32.mrf.mxu0
    %v185 = vadd.f32 %v113, %v184
    %v186 = vpop.f32.mrf.mxu0
    %187 = vdwg.mxu0
    %v188 = vmax.f32 %v185, 0.0
    %s189 = scalar_lea.vmem %s1, 144
    %v190 = vld [vmem:[%s189] sm:$0xff]
    %v191 = vld [vmem:[%s189 + $0x8] sm:$0xff]
    %v192 = vld [vmem:[%s189 + $0x10] sm:$0xff]
    %v193 = vld [vmem:[%s189 + $0x18] sm:$0xff]
    %v194 = vld [vmem:[%s189 + $0x40] sm:$0x1]
    %v195 = vlaneseq
    %v196 = vshrl.u32 %v195, 7
    %v197 = vsub.s32 0, %v196
    %v198 = vrot.slane %v194, %v197
    %v200 = vsel %vm114, %v188, 0
    %202 = vmatprep.subr.mxu0 0.0
    %203 = vmatpush1.msra.mxu0 0.0
    %204 = vmatprep.subr.mxu0 0.0
    %205 = vmatpush1.msra.mxu0 0.0
    %206 = vmatprep.subr.mxu0 0.0
    %207 = vmatpush1.msra.mxu0 0.0
    %208 = vmatprep.subr.mxu0 0.0
    %209 = vmatpush1.msra.mxu0 0.0
    %210 = vmatprep.subr.mxu0 0.0
    %211 = vmatpush1.msra.mxu0 0.0
    %212 = vmatprep.subr.mxu0 0.0
    %213 = vmatpush1.msra.mxu0 0.0
    %214 = vmatprep.subr.mxu0 0.0
    %215 = vmatpush1.msra.mxu0 0.0
    %216 = vmatprep.subr.mxu0 0.0
    %217 = vmatpush1.msra.mxu0 0.0
    %218 = vmatprep.subr.mxu0 0.0
    %219 = vmatpush1.msra.mxu0 0.0
    %220 = vmatprep.subr.mxu0 0.0
    %221 = vmatpush1.msra.mxu0 0.0
    %222 = vmatprep.subr.mxu0 0.0
    %223 = vmatpush1.msra.mxu0 0.0
    %224 = vmatprep.subr.mxu0 0.0
    %225 = vmatpush1.msra.mxu0 0.0
    %226 = vmatprep.subr.mxu0 0.0
    %227 = vmatpush1.msra.mxu0 %v193
    %228 = vmatprep.subr.mxu0 0.0
    %229 = vmatpush1.msra.mxu0 %v192
    %230 = vmatprep.subr.mxu0 0.0
    %231 = vmatpush1.msra.mxu0 %v191
    %232 = vmatprep.subr.mxu0 0.0
    %233 = vmatpush1.msra.mxu0 %v190
    %234 = vmatprep.subr.mxu0 0.0
    %235 = vmatpush2.msra.mxu0 0.0
    %236 = vmatprep.subr.mxu0 0.0
    %237 = vmatpush2.msra.mxu0 0.0
    %238 = vmatprep.subr.mxu0 0.0
    %239 = vmatpush2.msra.mxu0 0.0
    %240 = vmatprep.subr.mxu0 0.0
    %241 = vmatpush2.msra.mxu0 0.0
    %242 = vmatprep.subr.mxu0 0.0
    %243 = vmatpush2.msra.mxu0 0.0
    %244 = vmatprep.subr.mxu0 0.0
    %245 = vmatpush2.msra.mxu0 0.0
    %246 = vmatprep.subr.mxu0 0.0
    %247 = vmatpush2.msra.mxu0 0.0
    %248 = vmatprep.subr.mxu0 0.0
    %249 = vmatpush2.msra.mxu0 0.0
    %250 = vmatprep.subr.mxu0 0.0
    %251 = vmatpush2.msra.mxu0 0.0
    %252 = vmatprep.subr.mxu0 0.0
    %253 = vmatpush2.msra.mxu0 0.0
    %254 = vmatprep.subr.mxu0 0.0
    %255 = vmatpush2.msra.mxu0 0.0
    %256 = vmatprep.subr.mxu0 0.0
    %257 = vmatpush2.msra.mxu0 0.0
    %258 = vmatprep.subr.mxu0 0.0
    %259 = vmatpush2.msra.mxu0 0.0
    %260 = vmatprep.subr.mxu0 0.0
    %261 = vmatpush2.msra.mxu0 0.0
    %262 = vmatprep.subr.mxu0 0.0
    %263 = vmatpush2.msra.mxu0 0.0
    %264 = vmatprep.subr.mxu0 0.0
    %265 = vmatpush2.msra.mxu0 0.0
    %266 = vmatprep.mubr.f32.mxu0 0.0
    %267 = vmatmul.mubr.f32.gmra.mxu0 %v200
    %v268 = vpop.f32.mrf.mxu0
    %v269 = vadd.f32 %v198, %v268
    %v270 = vpop.f32.mrf.mxu0
    %271 = vdwg.mxu0
    %v272 = vmax.f32 %v269, 0.0
    %s273 = scalar_lea.vmem %s1, 216
    %v274 = vld [vmem:[%s273] sm:$0xff]
    %v275 = vld [vmem:[%s273 + $0x8] sm:$0xff]
    %v276 = vld [vmem:[%s273 + $0x10] sm:$0xff]
    %v277 = vld [vmem:[%s273 + $0x18] sm:$0xff]
    %v278 = vld [vmem:[%s273 + $0x40] sm:$0x1]
    %v279 = vlaneseq
    %v280 = vshrl.u32 %v279, 7
    %v281 = vsub.s32 0, %v280
    %v282 = vrot.slane %v278, %v281
    %v284 = vsel %vm114, %v272, 0
    %286 = vmatprep.subr.mxu0 0.0
    %287 = vmatpush1.msra.mxu0 0.0
    %288 = vmatprep.subr.mxu0 0.0
    %289 = vmatpush1.msra.mxu0 0.0
    %290 = vmatprep.subr.mxu0 0.0
    %291 = vmatpush1.msra.mxu0 0.0
    %292 = vmatprep.subr.mxu0 0.0
    %293 = vmatpush1.msra.mxu0 0.0
    %294 = vmatprep.subr.mxu0 0.0
    %295 = vmatpush1.msra.mxu0 0.0
    %296 = vmatprep.subr.mxu0 0.0
    %297 = vmatpush1.msra.mxu0 0.0
    %298 = vmatprep.subr.mxu0 0.0
    %299 = vmatpush1.msra.mxu0 0.0
    %300 = vmatprep.subr.mxu0 0.0
    %301 = vmatpush1.msra.mxu0 0.0
    %302 = vmatprep.subr.mxu0 0.0
    %303 = vmatpush1.msra.mxu0 0.0
    %304 = vmatprep.subr.mxu0 0.0
    %305 = vmatpush1.msra.mxu0 0.0
    %306 = vmatprep.subr.mxu0 0.0
    %307 = vmatpush1.msra.mxu0 0.0
    %308 = vmatprep.subr.mxu0 0.0
    %309 = vmatpush1.msra.mxu0 0.0
    %310 = vmatprep.subr.mxu0 0.0
    %311 = vmatpush1.msra.mxu0 %v277
    %312 = vmatprep.subr.mxu0 0.0
    %313 = vmatpush1.msra.mxu0 %v276
    %314 = vmatprep.subr.mxu0 0.0
    %315 = vmatpush1.msra.mxu0 %v275
    %316 = vmatprep.subr.mxu0 0.0
    %317 = vmatpush1.msra.mxu0 %v274
    %318 = vmatprep.subr.mxu0 0.0
    %319 = vmatpush2.msra.mxu0 0.0
    %320 = vmatprep.subr.mxu0 0.0
    %321 = vmatpush2.msra.mxu0 0.0
    %322 = vmatprep.subr.mxu0 0.0
    %323 = vmatpush2.msra.mxu0 0.0
    %324 = vmatprep.subr.mxu0 0.0
    %325 = vmatpush2.msra.mxu0 0.0
    %326 = vmatprep.subr.mxu0 0.0
    %327 = vmatpush2.msra.mxu0 0.0
    %328 = vmatprep.subr.mxu0 0.0
    %329 = vmatpush2.msra.mxu0 0.0
    %330 = vmatprep.subr.mxu0 0.0
    %331 = vmatpush2.msra.mxu0 0.0
    %332 = vmatprep.subr.mxu0 0.0
    %333 = vmatpush2.msra.mxu0 0.0
    %334 = vmatprep.subr.mxu0 0.0
    %335 = vmatpush2.msra.mxu0 0.0
    %336 = vmatprep.subr.mxu0 0.0
    %337 = vmatpush2.msra.mxu0 0.0
    %338 = vmatprep.subr.mxu0 0.0
    %339 = vmatpush2.msra.mxu0 0.0
    %340 = vmatprep.subr.mxu0 0.0
    %341 = vmatpush2.msra.mxu0 0.0
    %342 = vmatprep.subr.mxu0 0.0
    %343 = vmatpush2.msra.mxu0 0.0
    %344 = vmatprep.subr.mxu0 0.0
    %345 = vmatpush2.msra.mxu0 0.0
    %346 = vmatprep.subr.mxu0 0.0
    %347 = vmatpush2.msra.mxu0 0.0
    %348 = vmatprep.subr.mxu0 0.0
    %349 = vmatpush2.msra.mxu0 0.0
    %350 = vmatprep.mubr.f32.mxu0 0.0
    %351 = vmatmul.mubr.f32.gmra.mxu0 %v284
    %v352 = vpop.f32.mrf.mxu0
    %v353 = vadd.f32 %v282, %v352
    %v354 = vpop.f32.mrf.mxu0
    %355 = vdwg.mxu0
    %v356 = vmul.f32 %v353, 0.5
    %v357 = vmul.f32 %v356, 1.442695
    %v358 = vpow.pop %v357
    %v359 = vld [vmem:[%s2] sm:$0x3]
    %361 = vrot.lane.b32.xlu0 %v358, 112
    %v362 = vpop.permute.xlu0 %361
    %v364 = vmul.f32 %v359, %v362
    %v365 = vadd.f32 %v364, %v353
    %367 = vrot.lane.b32.xlu0 %v353, 16
    %v368 = vpop.permute.xlu0 %367
    %vm370 = vcmask 130048
    %v371 = vsel %vm370, %v365, %v368
    %vm372 = vcmask 386048
    %373 = vst.msk [vmem:[#allocation2] sm:$0x3] %vm372, %v371
    // Predicated region
    $region14: #{tpu_custom_call.1} parent=1 // pred_check
      _
    $region15: #{tpu_custom_call.1} parent=1 // pred_check_branch
      %375 = sbr.rel (0) target = $region17
    $region16: #{tpu_custom_call.1} parent=1 // pred_region
      %s377 = ssub.s32 32, 32
      %378 = vsyncadd [#allocation3], %s377
      %s380 = sshll.u32 [#allocation2], 4
      %s381 = int_to_ptr.vmem [resolvable:$true] %s380
      %383 = dma.vmem_to_hbm [thread:$0]  %s381, 32, %s3, [#allocation3]
    $region17: #{tpu_custom_call.1} parent=1 // pred_fallthru
      _
    // Predicated region
    $region18: #{tpu_custom_call.1} parent=1 // pred_check
      _
    $region19: #{tpu_custom_call.1} parent=1 // pred_check_branch
      %385 = sbr.rel (0) target = $region21
    $region20: #{tpu_custom_call.1} parent=1 // pred_region
      %386 = dma.done [#allocation3], 32
    $region21: #{tpu_custom_call.1} parent=1 // pred_fallthru
      _
    %387 = vsyncpa [#allocation3], 1

</llo_original>
